<compile_context>
chip_gen: v7x
topology: tpu7x:2x2x1
jax: 0.10.0
libtpu: 0.0.40
codegen_flags: <defaults>
</compile_context>

<pallas_src>
import functools

import jax
import jax.numpy as jnp
from jax.experimental import pallas as pl
from jax.experimental.pallas import tpu as pltpu


def make_value_kernel(vpu_head: bool, n_action: int, compute_dtype):
    """Builds the kernel body. `vpu_head` / `n_action` / `compute_dtype` are
    static Python values closed over at trace time."""

    def kernel(x_ref, w1_ref, w2_ref, w3_ref, wv_ref, b_ref, out_ref):
        # Weights w1/w2/w3 are [in, out]; biases packed as
        # b_ref[0]=b1, b_ref[1]=b2, b_ref[2]=b3, b_ref[3][:n_action]=bv.
        # Dots accumulate in f32; bias-add / ReLU stay f32 (v5e-friendly).
        h = jnp.dot(x_ref[...], w1_ref[...],
                    preferred_element_type=jnp.float32)
        h = jnp.maximum(h + b_ref[0:1, :], 0.0)

        h = jnp.dot(h.astype(compute_dtype), w2_ref[...],
                    preferred_element_type=jnp.float32)
        h = jnp.maximum(h + b_ref[1:2, :], 0.0)

        h = jnp.dot(h.astype(compute_dtype), w3_ref[...],
                    preferred_element_type=jnp.float32)
        h = jnp.maximum(h + b_ref[2:3, :], 0.0)

        if vpu_head:
            # NormedLinear head with n_action == 1: the MXU pass would have a
            # single (0.8%-utilized) output column, so do it on the VPU
            # (broadcast multiply) + XLU (lane reduce) instead.
            # wv_ref is the PyTorch-layout row vector [1, H].
            v = jnp.sum(h * wv_ref[...].astype(jnp.float32),
                        axis=-1, keepdims=True)
        else:
            # General head: wv_ref is [H, n_action].
            v = jnp.dot(h.astype(compute_dtype), wv_ref[...],
                        preferred_element_type=jnp.float32)

        out_ref[...] = (v + b_ref[3:4, 0:n_action]).astype(out_ref.dtype)

    return kernel


def prepare_params(params, dtype=jnp.float32):
    """One-time conversion from PyTorch-style params ([out, in] weights,
    [out] biases) to the kernel layout. Do this at init, NOT per forward.

    dtype: operand dtype for the matmuls. jnp.bfloat16 is recommended on
    v6e/v7x (halves weight/activation DMA bytes and MXU passes); keep
    jnp.float32 on v5e or when exact f32 reference parity is required.
    Biases always stay f32 (elementwise math is done in f32 in-kernel)."""
    last_hidden = params["w1"].shape[0]
    n_action = params["wv"].shape[0]
    assert n_action <= last_hidden, (
        "bias packing requires n_action <= last_hidden "
        f"(got n_action={n_action}, last_hidden={last_hidden})")

    bias = jnp.zeros((4, last_hidden), jnp.float32)
    bias = bias.at[0, :].set(params["b1"])
    bias = bias.at[1, :].set(params["b2"])
    bias = bias.at[2, :].set(params["b3"])
    bias = bias.at[3, :n_action].set(params["bv"])

    if n_action == 1:
        # VPU value head: keep PyTorch row-vector layout [1, H], f32 is fine
        # (one tiny row; the multiply happens in f32 anyway).
        wv_head = jnp.asarray(params["wv"], jnp.float32)
    else:
        # MXU value head: [H, n_action]
        wv_head = jnp.asarray(params["wv"].T, dtype)

    return dict(
        w1t=jnp.asarray(params["w1"].T, dtype),   # [in, out]
        w2t=jnp.asarray(params["w2"].T, dtype),
        w3t=jnp.asarray(params["w3"].T, dtype),
        wv_head=wv_head,
        bias=bias,
        n_action=n_action,
        dtype=dtype,
    )


def value_module_forward(x, prepared, *, block_m=4096):
    """x: [batch, feature_extractor]. prepared: output of prepare_params().
    Single pallas_call; batch axis tiled, weights replicated per step."""
    B, F = x.shape
    w1t, w2t, w3t = prepared["w1t"], prepared["w2t"], prepared["w3t"]
    wv_head, bias = prepared["wv_head"], prepared["bias"]
    dtype = prepared["dtype"]
    n_action = prepared["n_action"]
    H = w1t.shape[1]
    vpu_head = (n_action == 1)

    x = x.astype(dtype)

    # Batch tile: one step if the batch is small; otherwise split into an
    # even number (>=2) of roughly-equal, sublane-aligned tiles so v7x's two
    # TensorCores can each take half via dimension_semantics=("parallel",).
    if B <= block_m:
        tm = B
    else:
        n_steps = 2 * pl.cdiv(B, 2 * block_m)       # even, >= 2
        tm = pl.cdiv(B, n_steps)
        tm = min(B, ((tm + 7) // 8) * 8)             # (8,128) sublane alignment
    grid = (pl.cdiv(B, tm),)

    # Weights/biases are replicated across batch tiles (same block every step).
    rep = lambda a: pl.BlockSpec(a.shape, lambda i: (0,) * a.ndim)

    flops = 2 * B * (F * H + H * H + H * H + H * n_action)
    bytes_accessed = int(
        x.dtype.itemsize * x.size
        + w1t.dtype.itemsize * (w1t.size + w2t.size + w3t.size)
        + wv_head.dtype.itemsize * wv_head.size
        + 4 * bias.size
        + 4 * B * n_action)

    kernel = make_value_kernel(vpu_head, n_action, dtype)

    return pl.pallas_call(
        kernel,
        out_shape=jax.ShapeDtypeStruct((B, n_action), jnp.float32),
        grid=grid,
        in_specs=[pl.BlockSpec((tm, F), lambda i: (i, 0)),
                  rep(w1t), rep(w2t), rep(w3t), rep(wv_head), rep(bias)],
        out_specs=pl.BlockSpec((tm, n_action), lambda i: (i, 0)),
        compiler_params=pltpu.CompilerParams(
            dimension_semantics=("parallel",)),
        cost_estimate=pl.CostEstimate(
            flops=flops, transcendentals=0, bytes_accessed=bytes_accessed),
    )(x, w1t, w2t, w3t, wv_head, bias)


def init_params(key, feature_extractor, last_hidden, n_action):
    """Deterministic synthetic init mimicking the PyTorch module.

    nn.Linear weights are [out, in]. The value head is a NormedLinear:
    weight rows rescaled to L2-norm == scale (0.1)."""
    ks = jax.random.split(key, 8)

    def linear(kw, kb, n_in, n_out):
        bound = 1.0 / jnp.sqrt(n_in)
        w = jax.random.uniform(kw, (n_out, n_in), jnp.float32, -bound, bound)
        b = jax.random.uniform(kb, (n_out,), jnp.float32, -bound, bound)
        return w, b

    w1, b1 = linear(ks[0], ks[1], feature_extractor, last_hidden)
    w2, b2 = linear(ks[2], ks[3], last_hidden, last_hidden)
    w3, b3 = linear(ks[4], ks[5], last_hidden, last_hidden)
    wv, bv = linear(ks[6], ks[7], last_hidden, n_action)
    # NormedLinear(scale=0.1): w *= scale / ||w||_2 (per output row)
    row_norm = jnp.linalg.norm(wv, ord=2, axis=1, keepdims=True)
    wv = wv * (0.1 / row_norm)

    return dict(w1=w1, b1=b1, w2=w2, b2=b2, w3=w3, b3=b3, wv=wv, bv=bv)


def _reference(x, p):
    h = jnp.maximum(x @ p["w1"].T + p["b1"], 0.0)
    h = jnp.maximum(h @ p["w2"].T + p["b2"], 0.0)
    h = jnp.maximum(h @ p["w3"].T + p["b3"], 0.0)
    return h @ p["wv"].T + p["bv"]


if __name__ == "__main__":
    # config: n_hidden=16, n_rnn_layers=1, rnn_directions=1, n_action=1
    n_hidden, n_layers, directions, n_action = 16, 1, 1, 1
    feature_extractor = n_hidden * n_layers * directions   # 16
    last_hidden = feature_extractor * 2                     # 32

    key = jax.random.PRNGKey(0)
    k_x, k_p, k_xb = jax.random.split(key, 3)
    params = init_params(k_p, feature_extractor, last_hidden, n_action)
    prepared = prepare_params(params)   # one-time layout conversion (f32)

    # --- production-size check (B=2, single grid step) ---
    batch = 2
    x = jax.random.normal(k_x, (batch, feature_extractor), jnp.float32)
    out = jax.block_until_ready(value_module_forward(x, prepared))
    expected = _reference(x, params)
    assert out.shape == (batch, n_action)
    assert jnp.allclose(out, expected, atol=1e-5, rtol=1e-5)

    # --- multi-step / partial-tile check (B=300, forced small block_m) ---
    batch_big = 300
    x_big = jax.random.normal(k_xb, (batch_big, feature_extractor), jnp.float32)
    out_big = jax.block_until_ready(
        value_module_forward(x_big, prepared, block_m=128))
    expected_big = _reference(x_big, params)
    assert out_big.shape == (batch_big, n_action)
    assert jnp.allclose(out_big, expected_big, atol=1e-5, rtol=1e-5)

    print("KERNEL_OK")
</pallas_src>

<mosaic_0001>
module attributes {stable_mosaic.version = 11 : i64} {
  func.func @kernel(%arg0: i32, %arg1: memref<2x16xf32, #tpu.memory_space<vmem>>, %arg2: memref<16x32xf32, #tpu.memory_space<vmem>>, %arg3: memref<32x32xf32, #tpu.memory_space<vmem>>, %arg4: memref<32x32xf32, #tpu.memory_space<vmem>>, %arg5: memref<1x32xf32, #tpu.memory_space<vmem>>, %arg6: memref<4x32xf32, #tpu.memory_space<vmem>>, %arg7: memref<2x1xf32, #tpu.memory_space<vmem>>) attributes {dimension_semantics = [#tpu.dimension_semantics<parallel>], iteration_bounds = array<i64: 1>, scalar_prefetch = 0 : i64, scratch_operands = 0 : i64, tpu.core_type = #tpu.core_type<tc>, window_params = [{transform_indices = @transform_0, window_bounds = array<i64: 2, 16>}, {pipeline_mode = #tpu.pipeline_mode<synchronous>, transform_indices = @transform_1, window_bounds = array<i64: 16, 32>}, {pipeline_mode = #tpu.pipeline_mode<synchronous>, transform_indices = @transform_2, window_bounds = array<i64: 32, 32>}, {pipeline_mode = #tpu.pipeline_mode<synchronous>, transform_indices = @transform_3, window_bounds = array<i64: 32, 32>}, {pipeline_mode = #tpu.pipeline_mode<synchronous>, transform_indices = @transform_4, window_bounds = array<i64: 1, 32>}, {pipeline_mode = #tpu.pipeline_mode<synchronous>, transform_indices = @transform_5, window_bounds = array<i64: 4, 32>}, {transform_indices = @transform_6, window_bounds = array<i64: 2, 1>}]} {
    %c0 = arith.constant 0 : index
    %c0_0 = arith.constant 0 : index
    %0 = vector.load %arg1[%c0, %c0_0] : memref<2x16xf32, #tpu.memory_space<vmem>>, vector<2x16xf32>
    %c0_1 = arith.constant 0 : index
    %c0_2 = arith.constant 0 : index
    %1 = vector.load %arg2[%c0_1, %c0_2] : memref<16x32xf32, #tpu.memory_space<vmem>>, vector<16x32xf32>
    %cst = arith.constant dense<0.000000e+00> : vector<2x32xf32>
    %2 = tpu.matmul %0, %1, %cst {dimension_numbers = #tpu.dot_dimension_numbers<[1], [0], [0], [1], [0, 0, 1, 1], [], []>} : vector<2x16xf32>, vector<16x32xf32>, vector<2x32xf32> -> vector<2x32xf32>
    %c0_3 = arith.constant 0 : index
    %c0_4 = arith.constant 0 : index
    %3 = vector.load %arg6[%c0_3, %c0_4] : memref<4x32xf32, #tpu.memory_space<vmem>>, vector<1x32xf32>
    %4 = vector.broadcast %3 : vector<1x32xf32> to vector<2x32xf32>
    %5 = arith.addf %2, %4 : vector<2x32xf32>
    %cst_5 = arith.constant 0.000000e+00 : f32
    %6 = vector.broadcast %cst_5 : f32 to vector<2x32xf32>
    %7 = arith.maximumf %5, %6 : vector<2x32xf32>
    %c0_6 = arith.constant 0 : index
    %c0_7 = arith.constant 0 : index
    %8 = vector.load %arg3[%c0_6, %c0_7] : memref<32x32xf32, #tpu.memory_space<vmem>>, vector<32x32xf32>
    %cst_8 = arith.constant dense<0.000000e+00> : vector<2x32xf32>
    %9 = tpu.matmul %7, %8, %cst_8 {dimension_numbers = #tpu.dot_dimension_numbers<[1], [0], [0], [1], [0, 0, 1, 1], [], []>} : vector<2x32xf32>, vector<32x32xf32>, vector<2x32xf32> -> vector<2x32xf32>
    %c1 = arith.constant 1 : index
    %c0_9 = arith.constant 0 : index
    %10 = vector.load %arg6[%c1, %c0_9] : memref<4x32xf32, #tpu.memory_space<vmem>>, vector<1x32xf32>
    %11 = vector.broadcast %10 : vector<1x32xf32> to vector<2x32xf32>
    %12 = arith.addf %9, %11 : vector<2x32xf32>
    %cst_10 = arith.constant 0.000000e+00 : f32
    %13 = vector.broadcast %cst_10 : f32 to vector<2x32xf32>
    %14 = arith.maximumf %12, %13 : vector<2x32xf32>
    %c0_11 = arith.constant 0 : index
    %c0_12 = arith.constant 0 : index
    %15 = vector.load %arg4[%c0_11, %c0_12] : memref<32x32xf32, #tpu.memory_space<vmem>>, vector<32x32xf32>
    %cst_13 = arith.constant dense<0.000000e+00> : vector<2x32xf32>
    %16 = tpu.matmul %14, %15, %cst_13 {dimension_numbers = #tpu.dot_dimension_numbers<[1], [0], [0], [1], [0, 0, 1, 1], [], []>} : vector<2x32xf32>, vector<32x32xf32>, vector<2x32xf32> -> vector<2x32xf32>
    %c2 = arith.constant 2 : index
    %c0_14 = arith.constant 0 : index
    %17 = vector.load %arg6[%c2, %c0_14] : memref<4x32xf32, #tpu.memory_space<vmem>>, vector<1x32xf32>
    %18 = vector.broadcast %17 : vector<1x32xf32> to vector<2x32xf32>
    %19 = arith.addf %16, %18 : vector<2x32xf32>
    %cst_15 = arith.constant 0.000000e+00 : f32
    %20 = vector.broadcast %cst_15 : f32 to vector<2x32xf32>
    %21 = arith.maximumf %19, %20 : vector<2x32xf32>
    %c0_16 = arith.constant 0 : index
    %c0_17 = arith.constant 0 : index
    %22 = vector.load %arg5[%c0_16, %c0_17] : memref<1x32xf32, #tpu.memory_space<vmem>>, vector<1x32xf32>
    %23 = vector.broadcast %22 : vector<1x32xf32> to vector<2x32xf32>
    %24 = arith.mulf %21, %23 : vector<2x32xf32>
    %cst_18 = arith.constant dense<0.000000e+00> : vector<2xf32>
    %25 = vector.multi_reduction <add>, %24, %cst_18 [1] : vector<2x32xf32> to vector<2xf32>
    %26 = vector.shape_cast %25 : vector<2xf32> to vector<2x1xf32>
    %c3 = arith.constant 3 : index
    %c0_19 = arith.constant 0 : index
    %27 = vector.load %arg6[%c3, %c0_19] : memref<4x32xf32, #tpu.memory_space<vmem>>, vector<1x1xf32>
    %28 = vector.broadcast %27 : vector<1x1xf32> to vector<2x1xf32>
    %29 = arith.addf %26, %28 : vector<2x1xf32>
    %c0_20 = arith.constant 0 : index
    %c0_21 = arith.constant 0 : index
    %30 = vector.load %arg7[%c0_20, %c0_21] : memref<2x1xf32, #tpu.memory_space<vmem>>, vector<2x1xf32>
    tpu.vector_store %arg7[%c0_20, %c0_21], %29 {strides = array<i32>} : memref<2x1xf32, #tpu.memory_space<vmem>>, vector<2x1xf32>,
    return
  }
  func.func @transform_0(%arg0: i32) -> (i32, i32) {
    %c0_i32 = arith.constant 0 : i32
    %c0_i32_0 = arith.constant 0 : i32
    return %arg0, %c0_i32 : i32, i32
  }
  func.func @transform_1(%arg0: i32) -> (i32, i32) {
    %c0_i32 = arith.constant 0 : i32
    %c0_i32_0 = arith.constant 0 : i32
    %c0_i32_1 = arith.constant 0 : i32
    return %c0_i32, %c0_i32_0 : i32, i32
  }
  func.func @transform_2(%arg0: i32) -> (i32, i32) {
    %c0_i32 = arith.constant 0 : i32
    %c0_i32_0 = arith.constant 0 : i32
    %c0_i32_1 = arith.constant 0 : i32
    return %c0_i32, %c0_i32_0 : i32, i32
  }
  func.func @transform_3(%arg0: i32) -> (i32, i32) {
    %c0_i32 = arith.constant 0 : i32
    %c0_i32_0 = arith.constant 0 : i32
    %c0_i32_1 = arith.constant 0 : i32
    return %c0_i32, %c0_i32_0 : i32, i32
  }
  func.func @transform_4(%arg0: i32) -> (i32, i32) {
    %c0_i32 = arith.constant 0 : i32
    %c0_i32_0 = arith.constant 0 : i32
    %c0_i32_1 = arith.constant 0 : i32
    return %c0_i32, %c0_i32_0 : i32, i32
  }
  func.func @transform_5(%arg0: i32) -> (i32, i32) {
    %c0_i32 = arith.constant 0 : i32
    %c0_i32_0 = arith.constant 0 : i32
    %c0_i32_1 = arith.constant 0 : i32
    return %c0_i32, %c0_i32_0 : i32, i32
  }
  func.func @transform_6(%arg0: i32) -> (i32, i32) {
    %c0_i32 = arith.constant 0 : i32
    %c0_i32_0 = arith.constant 0 : i32
    return %arg0, %c0_i32 : i32, i32
  }
}

</mosaic_0001>

<llo_original>
// kernel: tpu_custom_call.1
$region0: #{tpu_custom_call.1}
  #allocation0 [shape = 'u32[]', space=smem, size = 0x4, offset = 0x4, fixed_abs, tag = 'smem constant byte address 0x4 - core index']
  #allocation1 [shape = 'u32[144,128]{1,0:T(1,128)}', space=vmem, size = 0x12000, scoped, tag = 'internal scratch']
  %s0 = inlined_call_operand.hbm [shape: f32[2,16], index: 0, kind: input, shape index: {}]
  %s1 = inlined_call_operand.hbm [shape: f32[16,32], index: 1, kind: input, shape index: {}]
  %s2 = inlined_call_operand.hbm [shape: f32[32,32], index: 2, kind: input, shape index: {}]
  %s3 = inlined_call_operand.hbm [shape: f32[32,32], index: 3, kind: input, shape index: {}]
  %s4 = inlined_call_operand.vmem [shape: f32[1,32], index: 4, kind: input, shape index: {}]
  %s5 = inlined_call_operand.vmem [shape: f32[4,32], index: 5, kind: input, shape index: {}]
  %s6 = inlined_call_operand.vmem [shape: f32[2,1], index: 6, kind: output, shape index: {}]
  %s7 = sld [smem:[#allocation0]]
  $region50: #{tpu_custom_call.1} parent=0
    _
  %s9 = ssub.s32 1, %s7
  %s10 = scalar_select 0, %s9, %s7
  $region1: #{tpu_custom_call.1} parent=0
    #allocation2 [shape = 'u8[1024]{0}', space=vmem, size = 0x400, scoped, tag = 'input window, operand 0, single buffered']
    #allocation3 [shape = 's32[1]{0}', space=sflag, size = 0x4, scoped, tag = 'scoped memory for tpu_custom_call.1']
    #allocation4 [shape = 'u8[8192]{0}', space=vmem, size = 0x2000, scoped, tag = 'input window, operand 1, single buffered']
    #allocation5 [shape = 's32[1]{0}', space=sflag, size = 0x4, scoped, tag = 'scoped memory for tpu_custom_call.1']
    #allocation6 [shape = 'u8[16384]{0}', space=vmem, size = 0x4000, scoped, tag = 'input window, operand 2, single buffered']
    #allocation7 [shape = 'u8[16384]{0}', space=vmem, size = 0x4000, scoped, tag = 'input window, operand 3, single buffered']
    #allocation8 [shape = 's32[1]{0}', space=sflag, size = 0x4, scoped, tag = 'scoped memory for tpu_custom_call.1']
    %11 = vsyncpa [#allocation3], 0
    %12 = vsyncpa [#allocation5], 0
    %13 = vsyncpa [#allocation8], 0
    // Predicated region
    $region2: #{tpu_custom_call.1} parent=1 // pred_check
      _
    $region3: #{tpu_custom_call.1} parent=1 // pred_check_branch
      %15 = sbr.rel (0) target = $region5
    $region4: #{tpu_custom_call.1} parent=1 // pred_region
      %s17 = ssub.s32 32, 32
      %18 = vsyncadd [#allocation3], %s17
      %s20 = sshll.u32 [#allocation2], 4
      %s21 = int_to_ptr.vmem [resolvable:$true] %s20
      %23 = dma.hbm_to_vmem [thread:$0]  %s0, 32, %s21, [#allocation3]
    $region5: #{tpu_custom_call.1} parent=1 // pred_fallthru
      _
    // Predicated region
    $region6: #{tpu_custom_call.1} parent=1 // pred_check
      _
    $region7: #{tpu_custom_call.1} parent=1 // pred_check_branch
      %25 = sbr.rel (0) target = $region9
    $region8: #{tpu_custom_call.1} parent=1 // pred_region
      %s27 = ssub.s32 256, 256
      %28 = vsyncadd [#allocation5], %s27
      %s29 = sshll.u32 [#allocation4], 4
      %s30 = int_to_ptr.vmem [resolvable:$true] %s29
      %35 = dma.hbm_to_vmem [thread:$0]  %s1, 256, %s30, [#allocation5], 128, 128, 8
    $region9: #{tpu_custom_call.1} parent=1 // pred_fallthru
      _
    // Predicated region
    $region10: #{tpu_custom_call.1} parent=1 // pred_check
      _
    $region11: #{tpu_custom_call.1} parent=1 // pred_check_branch
      %37 = sbr.rel (0) target = $region13
    $region12: #{tpu_custom_call.1} parent=1 // pred_region
      %s39 = ssub.s32 512, 512
      %40 = vsyncadd [#allocation5], %s39
      %s41 = sshll.u32 [#allocation6], 4
      %s42 = int_to_ptr.vmem [resolvable:$true] %s41
      %47 = dma.hbm_to_vmem [thread:$0]  %s2, 512, %s42, [#allocation5], 128, 128, 8
    $region13: #{tpu_custom_call.1} parent=1 // pred_fallthru
      _
    // Predicated region
    $region14: #{tpu_custom_call.1} parent=1 // pred_check
      _
    $region15: #{tpu_custom_call.1} parent=1 // pred_check_branch
      %49 = sbr.rel (0) target = $region17
    $region16: #{tpu_custom_call.1} parent=1 // pred_region
      %s51 = ssub.s32 512, 512
      %52 = vsyncadd [#allocation8], %s51
      %s53 = sshll.u32 [#allocation7], 4
      %s54 = int_to_ptr.vmem [resolvable:$true] %s53
      %59 = dma.hbm_to_vmem [thread:$0]  %s3, 512, %s54, [#allocation8], 128, 128, 8
    $region17: #{tpu_custom_call.1} parent=1 // pred_fallthru
      _
    // Predicated region
    $region18: #{tpu_custom_call.1} parent=1 // pred_check
      _
    $region19: #{tpu_custom_call.1} parent=1 // pred_check_branch
      %61 = sbr.rel (0) target = $region21
    $region20: #{tpu_custom_call.1} parent=1 // pred_region
      _
    $region21: #{tpu_custom_call.1} parent=1 // pred_fallthru
      _
    // Predicated region
    $region22: #{tpu_custom_call.1} parent=1 // pred_check
      _
    $region23: #{tpu_custom_call.1} parent=1 // pred_check_branch
      %63 = sbr.rel (0) target = $region25
    $region24: #{tpu_custom_call.1} parent=1 // pred_region
      _
    $region25: #{tpu_custom_call.1} parent=1 // pred_fallthru
      _
    // Predicated region
    $region26: #{tpu_custom_call.1} parent=1 // pred_check
      _
    $region27: #{tpu_custom_call.1} parent=1 // pred_check_branch
      %65 = sbr.rel (0) target = $region29
    $region28: #{tpu_custom_call.1} parent=1 // pred_region
      %66 = dma.done [#allocation3], 32
    $region29: #{tpu_custom_call.1} parent=1 // pred_fallthru
      _
    // Predicated region
    $region30: #{tpu_custom_call.1} parent=1 // pred_check
      _
    $region31: #{tpu_custom_call.1} parent=1 // pred_check_branch
      %68 = sbr.rel (0) target = $region33
    $region32: #{tpu_custom_call.1} parent=1 // pred_region
      %69 = dma.done [#allocation5], 256
    $region33: #{tpu_custom_call.1} parent=1 // pred_fallthru
      _
    // Predicated region
    $region34: #{tpu_custom_call.1} parent=1 // pred_check
      _
    $region35: #{tpu_custom_call.1} parent=1 // pred_check_branch
      %71 = sbr.rel (0) target = $region37
    $region36: #{tpu_custom_call.1} parent=1 // pred_region
      %72 = dma.done [#allocation5], 512
    $region37: #{tpu_custom_call.1} parent=1 // pred_fallthru
      _
    // Predicated region
    $region38: #{tpu_custom_call.1} parent=1 // pred_check
      _
    $region39: #{tpu_custom_call.1} parent=1 // pred_check_branch
      %74 = sbr.rel (0) target = $region41
    $region40: #{tpu_custom_call.1} parent=1 // pred_region
      %75 = dma.done [#allocation8], 512
    $region41: #{tpu_custom_call.1} parent=1 // pred_fallthru
      _
    %v76 = vld [vmem:[#allocation2] sm:$0x3]
    %v77 = vld [vmem:[#allocation4] sm:$0xff]
    %v78 = vld [vmem:[#allocation4 + $0x8] sm:$0xff]
    %v79 = vld [vmem:[%s5] sm:$0x1]
    %v80 = vlaneseq
    %v81 = vshrl.u32 %v80, 7
    %v82 = vsub.s32 0, %v81
    %v83 = vrot.slane %v79, %v82
    %vm84 = vcmask 130048
    %v86 = vsel %vm84, %v76, 0
    %88 = vmatprep.subr.mxu0 0.0
    %89 = vmatpush1.msra.mxu0 %v77
    %90 = vmatprep.subr.mxu0 0.0
    %91 = vmatpush1.msra.mxu0 %v78
    %92 = vmatprep.subr.mxu0 0.0
    %93 = vmatpush1.msra.mxu0 0.0
    %94 = vmatprep.subr.mxu0 0.0
    %95 = vmatpush1.msra.mxu0 0.0
    %96 = vmatprep.subr.mxu0 0.0
    %97 = vmatpush1.msra.mxu0 0.0
    %98 = vmatprep.subr.mxu0 0.0
    %99 = vmatpush1.msra.mxu0 0.0
    %100 = vmatprep.subr.mxu0 0.0
    %101 = vmatpush1.msra.mxu0 0.0
    %102 = vmatprep.subr.mxu0 0.0
    %103 = vmatpush1.msra.mxu0 0.0
    %104 = vmatprep.subr.mxu0 0.0
    %105 = vmatpush1.msra.mxu0 0.0
    %106 = vmatprep.subr.mxu0 0.0
    %107 = vmatpush1.msra.mxu0 0.0
    %108 = vmatprep.subr.mxu0 0.0
    %109 = vmatpush1.msra.mxu0 0.0
    %110 = vmatprep.subr.mxu0 0.0
    %111 = vmatpush1.msra.mxu0 0.0
    %112 = vmatprep.subr.mxu0 0.0
    %113 = vmatpush1.msra.mxu0 0.0
    %114 = vmatprep.subr.mxu0 0.0
    %115 = vmatpush1.msra.mxu0 0.0
    %116 = vmatprep.subr.mxu0 0.0
    %117 = vmatpush1.msra.mxu0 0.0
    %118 = vmatprep.subr.mxu0 0.0
    %119 = vmatpush1.msra.mxu0 0.0
    %120 = vmatprep.subr.mxu0 0.0
    %121 = vmatpush1.msra.mxu0 0.0
    %122 = vmatprep.subr.mxu0 0.0
    %123 = vmatpush1.msra.mxu0 0.0
    %124 = vmatprep.subr.mxu0 0.0
    %125 = vmatpush1.msra.mxu0 0.0
    %126 = vmatprep.subr.mxu0 0.0
    %127 = vmatpush1.msra.mxu0 0.0
    %128 = vmatprep.subr.mxu0 0.0
    %129 = vmatpush1.msra.mxu0 0.0
    %130 = vmatprep.subr.mxu0 0.0
    %131 = vmatpush1.msra.mxu0 0.0
    %132 = vmatprep.subr.mxu0 0.0
    %133 = vmatpush1.msra.mxu0 0.0
    %134 = vmatprep.subr.mxu0 0.0
    %135 = vmatpush1.msra.mxu0 0.0
    %136 = vmatprep.subr.mxu0 0.0
    %137 = vmatpush1.msra.mxu0 0.0
    %138 = vmatprep.subr.mxu0 0.0
    %139 = vmatpush1.msra.mxu0 0.0
    %140 = vmatprep.subr.mxu0 0.0
    %141 = vmatpush1.msra.mxu0 0.0
    %142 = vmatprep.subr.mxu0 0.0
    %143 = vmatpush1.msra.mxu0 0.0
    %144 = vmatprep.subr.mxu0 0.0
    %145 = vmatpush1.msra.mxu0 0.0
    %146 = vmatprep.subr.mxu0 0.0
    %147 = vmatpush1.msra.mxu0 0.0
    %148 = vmatprep.subr.mxu0 0.0
    %149 = vmatpush1.msra.mxu0 0.0
    %150 = vmatprep.subr.mxu0 0.0
    %151 = vmatpush1.msra.mxu0 0.0
    %152 = vmatprep.mubr.f32.mxu0 0.0
    %153 = vmatmul.mubr.f32.gmra.mrb[0].mxu0 %v86
    %v154 = vpop.f32.mrb[0].mxu0
    %v155 = vadd.f32 %v83, %v154
    %v156 = vpop.f32.mrb[0].mxu0
    %157 = vdwg.mxu0
    %v158 = vmax.f32 %v155, 0.0
    %v159 = vld [vmem:[#allocation6] sm:$0xff]
    %v160 = vld [vmem:[#allocation6 + $0x8] sm:$0xff]
    %v161 = vld [vmem:[#allocation6 + $0x10] sm:$0xff]
    %v162 = vld [vmem:[#allocation6 + $0x18] sm:$0xff]
    %v163 = vld [vmem:[%s5 + $0x1] sm:$0x1]
    %v164 = vlaneseq
    %v165 = vshrl.u32 %v164, 7
    %v166 = vsub.s32 0, %v165
    %v167 = vrot.slane %v163, %v166
    %vm168 = vcmask 261120
    %v170 = vsel %vm168, %v158, 0
    %172 = vmatprep.subr.mxu0 0.0
    %173 = vmatpush1.msra.mxu0 %v159
    %174 = vmatprep.subr.mxu0 0.0
    %175 = vmatpush1.msra.mxu0 %v160
    %176 = vmatprep.subr.mxu0 0.0
    %177 = vmatpush1.msra.mxu0 %v161
    %178 = vmatprep.subr.mxu0 0.0
    %179 = vmatpush1.msra.mxu0 %v162
    %180 = vmatprep.subr.mxu0 0.0
    %181 = vmatpush1.msra.mxu0 0.0
    %182 = vmatprep.subr.mxu0 0.0
    %183 = vmatpush1.msra.mxu0 0.0
    %184 = vmatprep.subr.mxu0 0.0
    %185 = vmatpush1.msra.mxu0 0.0
    %186 = vmatprep.subr.mxu0 0.0
    %187 = vmatpush1.msra.mxu0 0.0
    %188 = vmatprep.subr.mxu0 0.0
    %189 = vmatpush1.msra.mxu0 0.0
    %190 = vmatprep.subr.mxu0 0.0
    %191 = vmatpush1.msra.mxu0 0.0
    %192 = vmatprep.subr.mxu0 0.0
    %193 = vmatpush1.msra.mxu0 0.0
    %194 = vmatprep.subr.mxu0 0.0
    %195 = vmatpush1.msra.mxu0 0.0
    %196 = vmatprep.subr.mxu0 0.0
    %197 = vmatpush1.msra.mxu0 0.0
    %198 = vmatprep.subr.mxu0 0.0
    %199 = vmatpush1.msra.mxu0 0.0
    %200 = vmatprep.subr.mxu0 0.0
    %201 = vmatpush1.msra.mxu0 0.0
    %202 = vmatprep.subr.mxu0 0.0
    %203 = vmatpush1.msra.mxu0 0.0
    %204 = vmatprep.subr.mxu0 0.0
    %205 = vmatpush1.msra.mxu0 0.0
    %206 = vmatprep.subr.mxu0 0.0
    %207 = vmatpush1.msra.mxu0 0.0
    %208 = vmatprep.subr.mxu0 0.0
    %209 = vmatpush1.msra.mxu0 0.0
    %210 = vmatprep.subr.mxu0 0.0
    %211 = vmatpush1.msra.mxu0 0.0
    %212 = vmatprep.subr.mxu0 0.0
    %213 = vmatpush1.msra.mxu0 0.0
    %214 = vmatprep.subr.mxu0 0.0
    %215 = vmatpush1.msra.mxu0 0.0
    %216 = vmatprep.subr.mxu0 0.0
    %217 = vmatpush1.msra.mxu0 0.0
    %218 = vmatprep.subr.mxu0 0.0
    %219 = vmatpush1.msra.mxu0 0.0
    %220 = vmatprep.subr.mxu0 0.0
    %221 = vmatpush1.msra.mxu0 0.0
    %222 = vmatprep.subr.mxu0 0.0
    %223 = vmatpush1.msra.mxu0 0.0
    %224 = vmatprep.subr.mxu0 0.0
    %225 = vmatpush1.msra.mxu0 0.0
    %226 = vmatprep.subr.mxu0 0.0
    %227 = vmatpush1.msra.mxu0 0.0
    %228 = vmatprep.subr.mxu0 0.0
    %229 = vmatpush1.msra.mxu0 0.0
    %230 = vmatprep.subr.mxu0 0.0
    %231 = vmatpush1.msra.mxu0 0.0
    %232 = vmatprep.subr.mxu0 0.0
    %233 = vmatpush1.msra.mxu0 0.0
    %234 = vmatprep.subr.mxu0 0.0
    %235 = vmatpush1.msra.mxu0 0.0
    %236 = vmatprep.mubr.f32.mxu0 0.0
    %237 = vmatmul.mubr.f32.gmra.mrb[0].mxu0 %v170
    %v238 = vpop.f32.mrb[0].mxu0
    %v239 = vadd.f32 %v167, %v238
    %v240 = vpop.f32.mrb[0].mxu0
    %241 = vdwg.mxu0
    %v242 = vmax.f32 %v239, 0.0
    %v243 = vld [vmem:[#allocation7] sm:$0xff]
    %v244 = vld [vmem:[#allocation7 + $0x8] sm:$0xff]
    %v245 = vld [vmem:[#allocation7 + $0x10] sm:$0xff]
    %v246 = vld [vmem:[#allocation7 + $0x18] sm:$0xff]
    %v247 = vld [vmem:[%s5 + $0x2] sm:$0x1]
    %v248 = vlaneseq
    %v249 = vshrl.u32 %v248, 7
    %v250 = vsub.s32 0, %v249
    %v251 = vrot.slane %v247, %v250
    %v253 = vsel %vm168, %v242, 0
    %255 = vmatprep.subr.mxu0 0.0
    %256 = vmatpush1.msra.mxu0 %v243
    %257 = vmatprep.subr.mxu0 0.0
    %258 = vmatpush1.msra.mxu0 %v244
    %259 = vmatprep.subr.mxu0 0.0
    %260 = vmatpush1.msra.mxu0 %v245
    %261 = vmatprep.subr.mxu0 0.0
    %262 = vmatpush1.msra.mxu0 %v246
    %263 = vmatprep.subr.mxu0 0.0
    %264 = vmatpush1.msra.mxu0 0.0
    %265 = vmatprep.subr.mxu0 0.0
    %266 = vmatpush1.msra.mxu0 0.0
    %267 = vmatprep.subr.mxu0 0.0
    %268 = vmatpush1.msra.mxu0 0.0
    %269 = vmatprep.subr.mxu0 0.0
    %270 = vmatpush1.msra.mxu0 0.0
    %271 = vmatprep.subr.mxu0 0.0
    %272 = vmatpush1.msra.mxu0 0.0
    %273 = vmatprep.subr.mxu0 0.0
    %274 = vmatpush1.msra.mxu0 0.0
    %275 = vmatprep.subr.mxu0 0.0
    %276 = vmatpush1.msra.mxu0 0.0
    %277 = vmatprep.subr.mxu0 0.0
    %278 = vmatpush1.msra.mxu0 0.0
    %279 = vmatprep.subr.mxu0 0.0
    %280 = vmatpush1.msra.mxu0 0.0
    %281 = vmatprep.subr.mxu0 0.0
    %282 = vmatpush1.msra.mxu0 0.0
    %283 = vmatprep.subr.mxu0 0.0
    %284 = vmatpush1.msra.mxu0 0.0
    %285 = vmatprep.subr.mxu0 0.0
    %286 = vmatpush1.msra.mxu0 0.0
    %287 = vmatprep.subr.mxu0 0.0
    %288 = vmatpush1.msra.mxu0 0.0
    %289 = vmatprep.subr.mxu0 0.0
    %290 = vmatpush1.msra.mxu0 0.0
    %291 = vmatprep.subr.mxu0 0.0
    %292 = vmatpush1.msra.mxu0 0.0
    %293 = vmatprep.subr.mxu0 0.0
    %294 = vmatpush1.msra.mxu0 0.0
    %295 = vmatprep.subr.mxu0 0.0
    %296 = vmatpush1.msra.mxu0 0.0
    %297 = vmatprep.subr.mxu0 0.0
    %298 = vmatpush1.msra.mxu0 0.0
    %299 = vmatprep.subr.mxu0 0.0
    %300 = vmatpush1.msra.mxu0 0.0
    %301 = vmatprep.subr.mxu0 0.0
    %302 = vmatpush1.msra.mxu0 0.0
    %303 = vmatprep.subr.mxu0 0.0
    %304 = vmatpush1.msra.mxu0 0.0
    %305 = vmatprep.subr.mxu0 0.0
    %306 = vmatpush1.msra.mxu0 0.0
    %307 = vmatprep.subr.mxu0 0.0
    %308 = vmatpush1.msra.mxu0 0.0
    %309 = vmatprep.subr.mxu0 0.0
    %310 = vmatpush1.msra.mxu0 0.0
    %311 = vmatprep.subr.mxu0 0.0
    %312 = vmatpush1.msra.mxu0 0.0
    %313 = vmatprep.subr.mxu0 0.0
    %314 = vmatpush1.msra.mxu0 0.0
    %315 = vmatprep.subr.mxu0 0.0
    %316 = vmatpush1.msra.mxu0 0.0
    %317 = vmatprep.subr.mxu0 0.0
    %318 = vmatpush1.msra.mxu0 0.0
    %319 = vmatprep.mubr.f32.mxu0 0.0
    %320 = vmatmul.mubr.f32.gmra.mrb[0].mxu0 %v253
    %v321 = vpop.f32.mrb[0].mxu0
    %v322 = vadd.f32 %v251, %v321
    %v323 = vpop.f32.mrb[0].mxu0
    %324 = vdwg.mxu0
    %v325 = vmax.f32 %v322, 0.0
    %v326 = vld [vmem:[%s4] sm:$0x1]
    %v328 = vlaneseq
    %v329 = vshrl.u32 %v328, 7
    %v330 = vsub.s32 0, %v329
    %v331 = vrot.slane %v326, %v330
    %v333 = vmul.f32 %v325, %v331
    %vm334 = vcmask 254976
    %v335 = vsel %vm334, %v333, 0.0
    %336 = vadd.xlane.f32.xlu0 %v335
    %v337 = vpop.xlane.xlu0 %336
    %v338 = vld [vmem:[%s5 + $0x3] sm:$0x1]
    %v339 = vlaneseq
    %v340 = vshrl.u32 %v339, 7
    %v341 = vsub.s32 0, %v340
    %v342 = vrot.slane %v338, %v341
    %v343 = vadd.f32 %v337, %v342
    %vm344 = vcmask 1024
    %345 = vst.msk [vmem:[%s6] sm:$0x3] %vm344, %v343
    // Predicated region
    $region42: #{tpu_custom_call.1} parent=1 // pred_check
      _
    $region43: #{tpu_custom_call.1} parent=1 // pred_check_branch
      %347 = sbr.rel (0) target = $region45
    $region44: #{tpu_custom_call.1} parent=1 // pred_region
      _
    $region45: #{tpu_custom_call.1} parent=1 // pred_fallthru
      _
    // Predicated region
    $region46: #{tpu_custom_call.1} parent=1 // pred_check
      _
    $region47: #{tpu_custom_call.1} parent=1 // pred_check_branch
      %349 = sbr.rel (0) target = $region49
    $region48: #{tpu_custom_call.1} parent=1 // pred_region
      _
    $region49: #{tpu_custom_call.1} parent=1 // pred_fallthru
      _
    %350 = vsyncpa [#allocation3], 1
    %351 = vsyncpa [#allocation5], 1
    %352 = vsyncpa [#allocation8], 1

</llo_original>
